<compile_context>
chip_gen: v7x
topology: tpu7x:2x2x1
jax: 0.10.0
libtpu: 0.0.40
codegen_flags: <defaults>
</compile_context>

<pallas_src>
import functools

import jax
import jax.numpy as jnp
import numpy as np
from jax import lax
from jax.experimental import pallas as pl
from jax.experimental.pallas import tpu as pltpu

EPS = 1e-5
NEG_SLOPE = 0.2


def _pick_block_b(N, C, HW, itemsize=4, max_block_bytes=1 << 20):
    """Pick samples-per-grid-step.

    Priority: (1) R = block_b*C is a multiple of the f32 sublane tile (8) so vregs are
    fully packed and the im2col concat is tile-aligned; (2) keep >= 2 grid steps when
    possible (pipelining, v7x dual-TC); (3) bounded per-step block size.  Blocks whose
    row count is neither a multiple of 8 nor the full row axis are BlockSpec-illegal
    and excluded.
    """
    cands = [d for d in range(1, N + 1) if N % d == 0 and ((d * C) % 8 == 0 or d == N)]
    packed = [d for d in cands if (d * C) % 8 == 0]
    pool = packed if packed else cands            # packing is the dominant win
    multi = [d for d in pool if N // d >= 2]      # then keep the pipeline / 2nd TC busy
    pool = multi if multi else pool
    fits = [d for d in pool if d * C * HW * itemsize <= max_block_bytes]
    return max(fits) if fits else min(pool)


def _in_res_block_kernel(x_ref, m_ref,
                         g1_ref, be1_ref, w1_ref, cb1_ref,
                         g2_ref, be2_ref, w2_ref, cb2_ref,
                         o_ref, *, H, W, mxu_dtype):
    HW = H * W
    R = x_ref.shape[0]                       # block_b * C rows, ordered (sample, channel)
    inv_hw = 1.0 / HW
    inv_hw_m1 = 1.0 / (HW - 1)

    x = x_ref[...].astype(jnp.float32)       # (R, HW), lane-dense

    # Reflection-pad border masks (host-precomputed); broadcast to the block shape once
    # per grid step (hoisted out of the tap loops — JAX does not CSE broadcasts).
    m = m_ref[...]
    def bmask(i):
        return jnp.broadcast_to(m[i:i + 1], (R, HW)) > 0.5
    col0, col_last, row0, row_last = bmask(0), bmask(1), bmask(2), bmask(3)

    def norm_leaky(h, gamma, beta):
        # InstanceNorm with unbiased variance (torch.var default, as used by the IN
        # module), fused affine, then LeakyReLU(0.2) — vectorized over all R rows.
        s1 = jnp.sum(h, axis=1, keepdims=True)
        s2 = jnp.sum(h * h, axis=1, keepdims=True)
        mean = s1 * inv_hw
        var = (s2 - s1 * mean) * inv_hw_m1
        scale = gamma * lax.rsqrt(var + EPS)          # rsqrt -> EUP slot (free-ish)
        shift = beta - mean * scale
        y = h * scale + shift
        return jnp.where(y > 0, y, NEG_SLOPE * y)

    def conv3x3_reflect(h, w_bd, cbias):
        # 3x3 conv with ReflectionPad2d(1) on the flat (R, HW) layout: 9 roll-shifted
        # taps (XLU) with border selects, stacked into a sublane-aligned im2col block
        # and contracted in ONE MXU matmul against the block-diagonal weight.
        left = pltpu.roll(h, 1, axis=1)               # value from (i, j-1)
        right = pltpu.roll(h, HW - 1, axis=1)         # value from (i, j+1)
        h_l = jnp.where(col0, right, left)            # reflect col -1 -> col 1
        h_r = jnp.where(col_last, left, right)        # reflect col W  -> col W-2
        taps = []
        for hh in (h_l, h, h_r):                      # kw = 0, 1, 2
            up = pltpu.roll(hh, W, axis=1)            # value from (i-1, j)
            down = pltpu.roll(hh, HW - W, axis=1)     # value from (i+1, j)
            taps.append((jnp.where(row0, down, up),       # kh = 0 (reflect row -1 -> 1)
                         hh,                               # kh = 1
                         jnp.where(row_last, up, down)))   # kh = 2 (reflect row H -> H-2)
        # im2col rows ordered (kh, kw, sample, cin); each piece is R rows, so the concat
        # is sublane-tile aligned whenever R % 8 == 0 (enforced by the block heuristic).
        im2col = jnp.concatenate(
            [taps[kw][kh] for kh in range(3) for kw in range(3)], axis=0)
        out = jnp.dot(w_bd, im2col.astype(mxu_dtype),
                      preferred_element_type=jnp.float32)
        return out + cbias

    h = norm_leaky(x, g1_ref[...], be1_ref[...])
    h = conv3x3_reflect(h, w1_ref[...], cb1_ref[...])
    h = norm_leaky(h, g2_ref[...], be2_ref[...])
    h = conv3x3_reflect(h, w2_ref[...], cb2_ref[...])
    # Residual: reuse the already-loaded input block.
    o_ref[...] = (h + x).astype(o_ref.dtype)


def in_res_block(x, params, *, block_b=None, mxu_dtype=jnp.float32):
    """x: (N, C, H, W). params: gamma1, beta1, w1, b1, gamma2, beta2, w2, b2."""
    N, C, H, W = x.shape
    assert H >= 2 and W >= 2, "ReflectionPad2d(1) requires H, W >= 2"
    HW = H * W

    if block_b is None:
        block_b = _pick_block_b(N, C, HW)
    assert N % block_b == 0
    R = block_b * C
    assert (R % 8 == 0) or (block_b == N), "row block must be sublane-aligned or full"

    x_flat = x.reshape(N * C, HW)                     # packed, lane-dense layout

    # Reflection border masks for the flat (HW) layout, precomputed host-side.
    flat = np.arange(HW)
    col = flat % W
    masks = jnp.asarray(np.stack([col == 0, col == W - 1,
                                  flat < W, flat >= (H - 1) * W]).astype(np.float32))

    def tile_rows(v):  # per-channel (C,) -> per-row (R, 1), rows ordered (sample, channel)
        return jnp.tile(jnp.asarray(v, jnp.float32).reshape(C), block_b).reshape(R, 1)

    def prep_weight(w):
        # (Cout, Cin, 3, 3) -> block-diagonal (R, 9R); columns ordered (kh, kw, sample,
        # cin) to match the in-kernel im2col stacking; per-sample blocks are (C, C).
        w = jnp.asarray(w, jnp.float32)
        eye_b = jnp.eye(block_b, dtype=jnp.float32)
        cols = [jnp.kron(eye_b, w[:, :, kh, kw]) for kh in range(3) for kw in range(3)]
        return jnp.concatenate(cols, axis=1).astype(mxu_dtype)

    g1, be1 = tile_rows(params["gamma1"]), tile_rows(params["beta1"])
    g2, be2 = tile_rows(params["gamma2"]), tile_rows(params["beta2"])
    cb1, cb2 = tile_rows(params["b1"]), tile_rows(params["b2"])
    w1, w2 = prep_weight(params["w1"]), prep_weight(params["w2"])

    act_spec = pl.BlockSpec((R, HW), lambda n: (n, 0))
    mask_spec = pl.BlockSpec((4, HW), lambda n: (0, 0))
    vec_spec = pl.BlockSpec((R, 1), lambda n: (0, 0))
    w_spec = pl.BlockSpec((R, 9 * R), lambda n: (0, 0))

    kernel = functools.partial(_in_res_block_kernel, H=H, W=W, mxu_dtype=mxu_dtype)

    # Rough per-step VMEM budget: double-buffered in/out blocks + ~20 (R, HW) f32
    # temporaries (taps + aligned im2col + h) + resident params/masks; keep headroom
    # for v7x's smaller (64 MiB physical) VMEM.
    block_bytes = R * HW * 4
    vmem_limit = int(min(96 << 20, max(32 << 20, 28 * block_bytes)))

    out = pl.pallas_call(
        kernel,
        out_shape=jax.ShapeDtypeStruct((N * C, HW), x.dtype),
        grid=(N // block_b,),
        in_specs=[act_spec, mask_spec,
                  vec_spec, vec_spec, w_spec, vec_spec,    # gamma1, beta1, w1, b1
                  vec_spec, vec_spec, w_spec, vec_spec],   # gamma2, beta2, w2, b2
        out_specs=act_spec,
        compiler_params=pltpu.CompilerParams(
            dimension_semantics=("parallel",),
            vmem_limit_bytes=vmem_limit),
    )(x_flat, masks, g1, be1, w1, cb1, g2, be2, w2, cb2)
    return out.reshape(N, C, H, W)


# ---------------- pure-JAX reference (for verification) ----------------
def _ref_forward(x, params):
    N, C, H, W = x.shape

    def inorm(h, g, b):
        mean = h.mean(axis=(2, 3), keepdims=True)
        d = h - mean
        var = (d * d).sum(axis=(2, 3), keepdims=True) / (H * W - 1)  # torch.var (unbiased)
        out = d / jnp.sqrt(var + EPS)
        return g.reshape(1, C, 1, 1) * out + b.reshape(1, C, 1, 1)

    def leaky(h):
        return jnp.where(h > 0, h, NEG_SLOPE * h)

    def pad(h):
        return jnp.pad(h, ((0, 0), (0, 0), (1, 1), (1, 1)), mode="reflect")

    def conv(h, w, b):
        y = lax.conv_general_dilated(h, w, (1, 1), "VALID",
                                     dimension_numbers=("NCHW", "OIHW", "NCHW"))
        return y + b.reshape(1, C, 1, 1)

    h = conv(pad(leaky(inorm(x, params["gamma1"], params["beta1"]))), params["w1"], params["b1"])
    h = conv(pad(leaky(inorm(h, params["gamma2"], params["beta2"]))), params["w2"], params["b2"])
    return h + x


if __name__ == "__main__":
    C, H, W = 4, 16, 16
    key = jax.random.PRNGKey(0)
    keys = jax.random.split(key, 10)

    params = {
        # IN parameters (module init is ones/zeros; perturb to exercise the path)
        "gamma1": 1.0 + 0.1 * jax.random.normal(keys[1], (C,), dtype=jnp.float32),
        "beta1": 0.1 * jax.random.normal(keys[2], (C,), dtype=jnp.float32),
        "gamma2": 1.0 + 0.1 * jax.random.normal(keys[3], (C,), dtype=jnp.float32),
        "beta2": 0.1 * jax.random.normal(keys[4], (C,), dtype=jnp.float32),
        # Conv2d(dim, dim, 3) weights / biases
        "w1": 0.1 * jax.random.normal(keys[5], (C, C, 3, 3), dtype=jnp.float32),
        "b1": 0.1 * jax.random.normal(keys[6], (C,), dtype=jnp.float32),
        "w2": 0.1 * jax.random.normal(keys[7], (C, C, 3, 3), dtype=jnp.float32),
        "b2": 0.1 * jax.random.normal(keys[8], (C,), dtype=jnp.float32),
    }

    # Spec-sized check (N=2): single packed grid step (block_b=2 -> 8 rows/vreg-tile).
    x = jax.random.normal(keys[0], (2, C, H, W), dtype=jnp.float32)
    out = jax.block_until_ready(in_res_block(x, params))
    ref = jax.block_until_ready(_ref_forward(x, params))
    np.testing.assert_allclose(np.asarray(out), np.asarray(ref), atol=1e-4, rtol=1e-4)

    # Slightly larger batch: exercises block_b=2 with a multi-step grid (pipelining /
    # v7x dual-TC sharding path).
    x4 = jax.random.normal(keys[9], (4, C, H, W), dtype=jnp.float32)
    out4 = jax.block_until_ready(in_res_block(x4, params))
    ref4 = jax.block_until_ready(_ref_forward(x4, params))
    np.testing.assert_allclose(np.asarray(out4), np.asarray(ref4), atol=1e-4, rtol=1e-4)

    print("KERNEL_OK")
</pallas_src>

<mosaic_0001>
module attributes {stable_mosaic.version = 11 : i64} {
  func.func @_in_res_block_kernel(%arg0: i32, %arg1: memref<8x256xf32, #tpu.memory_space<vmem>>, %arg2: memref<4x256xf32, #tpu.memory_space<vmem>>, %arg3: memref<8x1xf32, #tpu.memory_space<vmem>>, %arg4: memref<8x1xf32, #tpu.memory_space<vmem>>, %arg5: memref<8x72xf32, #tpu.memory_space<vmem>>, %arg6: memref<8x1xf32, #tpu.memory_space<vmem>>, %arg7: memref<8x1xf32, #tpu.memory_space<vmem>>, %arg8: memref<8x1xf32, #tpu.memory_space<vmem>>, %arg9: memref<8x72xf32, #tpu.memory_space<vmem>>, %arg10: memref<8x1xf32, #tpu.memory_space<vmem>>, %arg11: memref<8x256xf32, #tpu.memory_space<vmem>>) attributes {dimension_semantics = [#tpu.dimension_semantics<parallel>], iteration_bounds = array<i64: 1>, scalar_prefetch = 0 : i64, scratch_operands = 0 : i64, tpu.core_type = #tpu.core_type<tc>, window_params = [{transform_indices = @transform_0, window_bounds = array<i64: 8, 256>}, {pipeline_mode = #tpu.pipeline_mode<synchronous>, transform_indices = @transform_1, window_bounds = array<i64: 4, 256>}, {pipeline_mode = #tpu.pipeline_mode<synchronous>, transform_indices = @transform_2, window_bounds = array<i64: 8, 1>}, {pipeline_mode = #tpu.pipeline_mode<synchronous>, transform_indices = @transform_3, window_bounds = array<i64: 8, 1>}, {pipeline_mode = #tpu.pipeline_mode<synchronous>, transform_indices = @transform_4, window_bounds = array<i64: 8, 72>}, {pipeline_mode = #tpu.pipeline_mode<synchronous>, transform_indices = @transform_5, window_bounds = array<i64: 8, 1>}, {pipeline_mode = #tpu.pipeline_mode<synchronous>, transform_indices = @transform_6, window_bounds = array<i64: 8, 1>}, {pipeline_mode = #tpu.pipeline_mode<synchronous>, transform_indices = @transform_7, window_bounds = array<i64: 8, 1>}, {pipeline_mode = #tpu.pipeline_mode<synchronous>, transform_indices = @transform_8, window_bounds = array<i64: 8, 72>}, {pipeline_mode = #tpu.pipeline_mode<synchronous>, transform_indices = @transform_9, window_bounds = array<i64: 8, 1>}, {transform_indices = @transform_10, window_bounds = array<i64: 8, 256>}]} {
    %c0 = arith.constant 0 : index
    %c0_0 = arith.constant 0 : index
    %0 = vector.load %arg1[%c0, %c0_0] : memref<8x256xf32, #tpu.memory_space<vmem>>, vector<8x256xf32>
    %c0_1 = arith.constant 0 : index
    %c0_2 = arith.constant 0 : index
    %1 = vector.load %arg2[%c0_1, %c0_2] : memref<4x256xf32, #tpu.memory_space<vmem>>, vector<4x256xf32>
    %2 = vector.extract_strided_slice %1 {offsets = [0, 0], sizes = [1, 256], strides = [1, 1]} : vector<4x256xf32> to vector<1x256xf32>
    %3 = vector.shape_cast %2 : vector<1x256xf32> to vector<1x256xf32>
    %4 = vector.broadcast %3 : vector<1x256xf32> to vector<8x256xf32>
    %cst = arith.constant 5.000000e-01 : f32
    %5 = vector.broadcast %cst : f32 to vector<8x256xf32>
    %6 = arith.cmpf ogt, %4, %5 : vector<8x256xf32>
    %7 = vector.extract_strided_slice %1 {offsets = [1, 0], sizes = [1, 256], strides = [1, 1]} : vector<4x256xf32> to vector<1x256xf32>
    %8 = vector.shape_cast %7 : vector<1x256xf32> to vector<1x256xf32>
    %9 = vector.broadcast %8 : vector<1x256xf32> to vector<8x256xf32>
    %cst_3 = arith.constant 5.000000e-01 : f32
    %10 = vector.broadcast %cst_3 : f32 to vector<8x256xf32>
    %11 = arith.cmpf ogt, %9, %10 : vector<8x256xf32>
    %12 = vector.extract_strided_slice %1 {offsets = [2, 0], sizes = [1, 256], strides = [1, 1]} : vector<4x256xf32> to vector<1x256xf32>
    %13 = vector.shape_cast %12 : vector<1x256xf32> to vector<1x256xf32>
    %14 = vector.broadcast %13 : vector<1x256xf32> to vector<8x256xf32>
    %cst_4 = arith.constant 5.000000e-01 : f32
    %15 = vector.broadcast %cst_4 : f32 to vector<8x256xf32>
    %16 = arith.cmpf ogt, %14, %15 : vector<8x256xf32>
    %17 = vector.extract_strided_slice %1 {offsets = [3, 0], sizes = [1, 256], strides = [1, 1]} : vector<4x256xf32> to vector<1x256xf32>
    %18 = vector.shape_cast %17 : vector<1x256xf32> to vector<1x256xf32>
    %19 = vector.broadcast %18 : vector<1x256xf32> to vector<8x256xf32>
    %cst_5 = arith.constant 5.000000e-01 : f32
    %20 = vector.broadcast %cst_5 : f32 to vector<8x256xf32>
    %21 = arith.cmpf ogt, %19, %20 : vector<8x256xf32>
    %c0_6 = arith.constant 0 : index
    %c0_7 = arith.constant 0 : index
    %22 = vector.load %arg3[%c0_6, %c0_7] : memref<8x1xf32, #tpu.memory_space<vmem>>, vector<8x1xf32>
    %c0_8 = arith.constant 0 : index
    %c0_9 = arith.constant 0 : index
    %23 = vector.load %arg4[%c0_8, %c0_9] : memref<8x1xf32, #tpu.memory_space<vmem>>, vector<8x1xf32>
    %cst_10 = arith.constant dense<0.000000e+00> : vector<8xf32>
    %24 = vector.multi_reduction <add>, %0, %cst_10 [1] : vector<8x256xf32> to vector<8xf32>
    %25 = vector.shape_cast %24 : vector<8xf32> to vector<8x1xf32>
    %26 = arith.mulf %0, %0 : vector<8x256xf32>
    %cst_11 = arith.constant dense<0.000000e+00> : vector<8xf32>
    %27 = vector.multi_reduction <add>, %26, %cst_11 [1] : vector<8x256xf32> to vector<8xf32>
    %28 = vector.shape_cast %27 : vector<8xf32> to vector<8x1xf32>
    %cst_12 = arith.constant 3.906250e-03 : f32
    %29 = vector.broadcast %cst_12 : f32 to vector<8x1xf32>
    %30 = arith.mulf %25, %29 : vector<8x1xf32>
    %31 = arith.mulf %25, %30 : vector<8x1xf32>
    %32 = arith.subf %28, %31 : vector<8x1xf32>
    %cst_13 = arith.constant 0.00392156886 : f32
    %33 = vector.broadcast %cst_13 : f32 to vector<8x1xf32>
    %34 = arith.mulf %32, %33 : vector<8x1xf32>
    %cst_14 = arith.constant 9.99999974E-6 : f32
    %35 = vector.broadcast %cst_14 : f32 to vector<8x1xf32>
    %36 = arith.addf %34, %35 : vector<8x1xf32>
    %37 = math.rsqrt %36 : vector<8x1xf32>
    %38 = arith.mulf %22, %37 : vector<8x1xf32>
    %39 = arith.mulf %30, %38 : vector<8x1xf32>
    %40 = arith.subf %23, %39 : vector<8x1xf32>
    %41 = vector.broadcast %38 : vector<8x1xf32> to vector<8x256xf32>
    %42 = arith.mulf %0, %41 : vector<8x256xf32>
    %43 = vector.broadcast %40 : vector<8x1xf32> to vector<8x256xf32>
    %44 = arith.addf %42, %43 : vector<8x256xf32>
    %cst_15 = arith.constant 0.000000e+00 : f32
    %45 = vector.broadcast %cst_15 : f32 to vector<8x256xf32>
    %46 = arith.cmpf ogt, %44, %45 : vector<8x256xf32>
    %cst_16 = arith.constant 2.000000e-01 : f32
    %47 = vector.broadcast %cst_16 : f32 to vector<8x256xf32>
    %48 = arith.mulf %47, %44 : vector<8x256xf32>
    %49 = arith.select %46, %44, %48 : vector<8x256xi1>, vector<8x256xf32>
    %c0_17 = arith.constant 0 : index
    %c0_18 = arith.constant 0 : index
    %50 = vector.load %arg5[%c0_17, %c0_18] : memref<8x72xf32, #tpu.memory_space<vmem>>, vector<8x72xf32>
    %c0_19 = arith.constant 0 : index
    %c0_20 = arith.constant 0 : index
    %51 = vector.load %arg6[%c0_19, %c0_20] : memref<8x1xf32, #tpu.memory_space<vmem>>, vector<8x1xf32>
    %c1_i32 = arith.constant 1 : i32
    %52 = tpu.dynamic_rotate %49 by %c1_i32 dim 1 : vector<8x256xf32>, i32 -> vector<8x256xf32>
    %c255_i32 = arith.constant 255 : i32
    %53 = tpu.dynamic_rotate %49 by %c255_i32 dim 1 : vector<8x256xf32>, i32 -> vector<8x256xf32>
    %54 = arith.select %6, %53, %52 : vector<8x256xi1>, vector<8x256xf32>
    %55 = arith.select %11, %52, %53 : vector<8x256xi1>, vector<8x256xf32>
    %c16_i32 = arith.constant 16 : i32
    %56 = tpu.dynamic_rotate %54 by %c16_i32 dim 1 : vector<8x256xf32>, i32 -> vector<8x256xf32>
    %c240_i32 = arith.constant 240 : i32
    %57 = tpu.dynamic_rotate %54 by %c240_i32 dim 1 : vector<8x256xf32>, i32 -> vector<8x256xf32>
    %58 = arith.select %16, %57, %56 : vector<8x256xi1>, vector<8x256xf32>
    %59 = arith.select %21, %56, %57 : vector<8x256xi1>, vector<8x256xf32>
    %c16_i32_21 = arith.constant 16 : i32
    %60 = tpu.dynamic_rotate %49 by %c16_i32_21 dim 1 : vector<8x256xf32>, i32 -> vector<8x256xf32>
    %c240_i32_22 = arith.constant 240 : i32
    %61 = tpu.dynamic_rotate %49 by %c240_i32_22 dim 1 : vector<8x256xf32>, i32 -> vector<8x256xf32>
    %62 = arith.select %16, %61, %60 : vector<8x256xi1>, vector<8x256xf32>
    %63 = arith.select %21, %60, %61 : vector<8x256xi1>, vector<8x256xf32>
    %c16_i32_23 = arith.constant 16 : i32
    %64 = tpu.dynamic_rotate %55 by %c16_i32_23 dim 1 : vector<8x256xf32>, i32 -> vector<8x256xf32>
    %c240_i32_24 = arith.constant 240 : i32
    %65 = tpu.dynamic_rotate %55 by %c240_i32_24 dim 1 : vector<8x256xf32>, i32 -> vector<8x256xf32>
    %66 = arith.select %16, %65, %64 : vector<8x256xi1>, vector<8x256xf32>
    %67 = arith.select %21, %64, %65 : vector<8x256xi1>, vector<8x256xf32>
    %68 = tpu.concatenate %58, %62, %66, %54, %49, %55, %59, %63, %67 in 0 : vector<8x256xf32>, vector<8x256xf32>, vector<8x256xf32>, vector<8x256xf32>, vector<8x256xf32>, vector<8x256xf32>, vector<8x256xf32>, vector<8x256xf32>, vector<8x256xf32> -> vector<72x256xf32>
    %cst_25 = arith.constant dense<0.000000e+00> : vector<8x256xf32>
    %69 = tpu.matmul %50, %68, %cst_25 {dimension_numbers = #tpu.dot_dimension_numbers<[1], [0], [0], [1], [0, 0, 1, 1], [], []>} : vector<8x72xf32>, vector<72x256xf32>, vector<8x256xf32> -> vector<8x256xf32>
    %70 = vector.broadcast %51 : vector<8x1xf32> to vector<8x256xf32>
    %71 = arith.addf %69, %70 : vector<8x256xf32>
    %c0_26 = arith.constant 0 : index
    %c0_27 = arith.constant 0 : index
    %72 = vector.load %arg7[%c0_26, %c0_27] : memref<8x1xf32, #tpu.memory_space<vmem>>, vector<8x1xf32>
    %c0_28 = arith.constant 0 : index
    %c0_29 = arith.constant 0 : index
    %73 = vector.load %arg8[%c0_28, %c0_29] : memref<8x1xf32, #tpu.memory_space<vmem>>, vector<8x1xf32>
    %cst_30 = arith.constant dense<0.000000e+00> : vector<8xf32>
    %74 = vector.multi_reduction <add>, %71, %cst_30 [1] : vector<8x256xf32> to vector<8xf32>
    %75 = vector.shape_cast %74 : vector<8xf32> to vector<8x1xf32>
    %76 = arith.mulf %71, %71 : vector<8x256xf32>
    %cst_31 = arith.constant dense<0.000000e+00> : vector<8xf32>
    %77 = vector.multi_reduction <add>, %76, %cst_31 [1] : vector<8x256xf32> to vector<8xf32>
    %78 = vector.shape_cast %77 : vector<8xf32> to vector<8x1xf32>
    %cst_32 = arith.constant 3.906250e-03 : f32
    %79 = vector.broadcast %cst_32 : f32 to vector<8x1xf32>
    %80 = arith.mulf %75, %79 : vector<8x1xf32>
    %81 = arith.mulf %75, %80 : vector<8x1xf32>
    %82 = arith.subf %78, %81 : vector<8x1xf32>
    %cst_33 = arith.constant 0.00392156886 : f32
    %83 = vector.broadcast %cst_33 : f32 to vector<8x1xf32>
    %84 = arith.mulf %82, %83 : vector<8x1xf32>
    %cst_34 = arith.constant 9.99999974E-6 : f32
    %85 = vector.broadcast %cst_34 : f32 to vector<8x1xf32>
    %86 = arith.addf %84, %85 : vector<8x1xf32>
    %87 = math.rsqrt %86 : vector<8x1xf32>
    %88 = arith.mulf %72, %87 : vector<8x1xf32>
    %89 = arith.mulf %80, %88 : vector<8x1xf32>
    %90 = arith.subf %73, %89 : vector<8x1xf32>
    %91 = vector.broadcast %88 : vector<8x1xf32> to vector<8x256xf32>
    %92 = arith.mulf %71, %91 : vector<8x256xf32>
    %93 = vector.broadcast %90 : vector<8x1xf32> to vector<8x256xf32>
    %94 = arith.addf %92, %93 : vector<8x256xf32>
    %cst_35 = arith.constant 0.000000e+00 : f32
    %95 = vector.broadcast %cst_35 : f32 to vector<8x256xf32>
    %96 = arith.cmpf ogt, %94, %95 : vector<8x256xf32>
    %cst_36 = arith.constant 2.000000e-01 : f32
    %97 = vector.broadcast %cst_36 : f32 to vector<8x256xf32>
    %98 = arith.mulf %97, %94 : vector<8x256xf32>
    %99 = arith.select %96, %94, %98 : vector<8x256xi1>, vector<8x256xf32>
    %c0_37 = arith.constant 0 : index
    %c0_38 = arith.constant 0 : index
    %100 = vector.load %arg9[%c0_37, %c0_38] : memref<8x72xf32, #tpu.memory_space<vmem>>, vector<8x72xf32>
    %c0_39 = arith.constant 0 : index
    %c0_40 = arith.constant 0 : index
    %101 = vector.load %arg10[%c0_39, %c0_40] : memref<8x1xf32, #tpu.memory_space<vmem>>, vector<8x1xf32>
    %c1_i32_41 = arith.constant 1 : i32
    %102 = tpu.dynamic_rotate %99 by %c1_i32_41 dim 1 : vector<8x256xf32>, i32 -> vector<8x256xf32>
    %c255_i32_42 = arith.constant 255 : i32
    %103 = tpu.dynamic_rotate %99 by %c255_i32_42 dim 1 : vector<8x256xf32>, i32 -> vector<8x256xf32>
    %104 = arith.select %6, %103, %102 : vector<8x256xi1>, vector<8x256xf32>
    %105 = arith.select %11, %102, %103 : vector<8x256xi1>, vector<8x256xf32>
    %c16_i32_43 = arith.constant 16 : i32
    %106 = tpu.dynamic_rotate %104 by %c16_i32_43 dim 1 : vector<8x256xf32>, i32 -> vector<8x256xf32>
    %c240_i32_44 = arith.constant 240 : i32
    %107 = tpu.dynamic_rotate %104 by %c240_i32_44 dim 1 : vector<8x256xf32>, i32 -> vector<8x256xf32>
    %108 = arith.select %16, %107, %106 : vector<8x256xi1>, vector<8x256xf32>
    %109 = arith.select %21, %106, %107 : vector<8x256xi1>, vector<8x256xf32>
    %c16_i32_45 = arith.constant 16 : i32
    %110 = tpu.dynamic_rotate %99 by %c16_i32_45 dim 1 : vector<8x256xf32>, i32 -> vector<8x256xf32>
    %c240_i32_46 = arith.constant 240 : i32
    %111 = tpu.dynamic_rotate %99 by %c240_i32_46 dim 1 : vector<8x256xf32>, i32 -> vector<8x256xf32>
    %112 = arith.select %16, %111, %110 : vector<8x256xi1>, vector<8x256xf32>
    %113 = arith.select %21, %110, %111 : vector<8x256xi1>, vector<8x256xf32>
    %c16_i32_47 = arith.constant 16 : i32
    %114 = tpu.dynamic_rotate %105 by %c16_i32_47 dim 1 : vector<8x256xf32>, i32 -> vector<8x256xf32>
    %c240_i32_48 = arith.constant 240 : i32
    %115 = tpu.dynamic_rotate %105 by %c240_i32_48 dim 1 : vector<8x256xf32>, i32 -> vector<8x256xf32>
    %116 = arith.select %16, %115, %114 : vector<8x256xi1>, vector<8x256xf32>
    %117 = arith.select %21, %114, %115 : vector<8x256xi1>, vector<8x256xf32>
    %118 = tpu.concatenate %108, %112, %116, %104, %99, %105, %109, %113, %117 in 0 : vector<8x256xf32>, vector<8x256xf32>, vector<8x256xf32>, vector<8x256xf32>, vector<8x256xf32>, vector<8x256xf32>, vector<8x256xf32>, vector<8x256xf32>, vector<8x256xf32> -> vector<72x256xf32>
    %cst_49 = arith.constant dense<0.000000e+00> : vector<8x256xf32>
    %119 = tpu.matmul %100, %118, %cst_49 {dimension_numbers = #tpu.dot_dimension_numbers<[1], [0], [0], [1], [0, 0, 1, 1], [], []>} : vector<8x72xf32>, vector<72x256xf32>, vector<8x256xf32> -> vector<8x256xf32>
    %120 = vector.broadcast %101 : vector<8x1xf32> to vector<8x256xf32>
    %121 = arith.addf %119, %120 : vector<8x256xf32>
    %122 = arith.addf %121, %0 : vector<8x256xf32>
    %c0_50 = arith.constant 0 : index
    %c0_51 = arith.constant 0 : index
    %123 = vector.load %arg11[%c0_50, %c0_51] : memref<8x256xf32, #tpu.memory_space<vmem>>, vector<8x256xf32>
    tpu.vector_store %arg11[%c0_50, %c0_51], %122 {strides = array<i32>} : memref<8x256xf32, #tpu.memory_space<vmem>>, vector<8x256xf32>,
    return
  }
  func.func @transform_0(%arg0: i32) -> (i32, i32) {
    %c0_i32 = arith.constant 0 : i32
    %c0_i32_0 = arith.constant 0 : i32
    return %arg0, %c0_i32 : i32, i32
  }
  func.func @transform_1(%arg0: i32) -> (i32, i32) {
    %c0_i32 = arith.constant 0 : i32
    %c0_i32_0 = arith.constant 0 : i32
    %c0_i32_1 = arith.constant 0 : i32
    return %c0_i32, %c0_i32_0 : i32, i32
  }
  func.func @transform_2(%arg0: i32) -> (i32, i32) {
    %c0_i32 = arith.constant 0 : i32
    %c0_i32_0 = arith.constant 0 : i32
    %c0_i32_1 = arith.constant 0 : i32
    return %c0_i32, %c0_i32_0 : i32, i32
  }
  func.func @transform_3(%arg0: i32) -> (i32, i32) {
    %c0_i32 = arith.constant 0 : i32
    %c0_i32_0 = arith.constant 0 : i32
    %c0_i32_1 = arith.constant 0 : i32
    return %c0_i32, %c0_i32_0 : i32, i32
  }
  func.func @transform_4(%arg0: i32) -> (i32, i32) {
    %c0_i32 = arith.constant 0 : i32
    %c0_i32_0 = arith.constant 0 : i32
    %c0_i32_1 = arith.constant 0 : i32
    return %c0_i32, %c0_i32_0 : i32, i32
  }
  func.func @transform_5(%arg0: i32) -> (i32, i32) {
    %c0_i32 = arith.constant 0 : i32
    %c0_i32_0 = arith.constant 0 : i32
    %c0_i32_1 = arith.constant 0 : i32
    return %c0_i32, %c0_i32_0 : i32, i32
  }
  func.func @transform_6(%arg0: i32) -> (i32, i32) {
    %c0_i32 = arith.constant 0 : i32
    %c0_i32_0 = arith.constant 0 : i32
    %c0_i32_1 = arith.constant 0 : i32
    return %c0_i32, %c0_i32_0 : i32, i32
  }
  func.func @transform_7(%arg0: i32) -> (i32, i32) {
    %c0_i32 = arith.constant 0 : i32
    %c0_i32_0 = arith.constant 0 : i32
    %c0_i32_1 = arith.constant 0 : i32
    return %c0_i32, %c0_i32_0 : i32, i32
  }
  func.func @transform_8(%arg0: i32) -> (i32, i32) {
    %c0_i32 = arith.constant 0 : i32
    %c0_i32_0 = arith.constant 0 : i32
    %c0_i32_1 = arith.constant 0 : i32
    return %c0_i32, %c0_i32_0 : i32, i32
  }
  func.func @transform_9(%arg0: i32) -> (i32, i32) {
    %c0_i32 = arith.constant 0 : i32
    %c0_i32_0 = arith.constant 0 : i32
    %c0_i32_1 = arith.constant 0 : i32
    return %c0_i32, %c0_i32_0 : i32, i32
  }
  func.func @transform_10(%arg0: i32) -> (i32, i32) {
    %c0_i32 = arith.constant 0 : i32
    %c0_i32_0 = arith.constant 0 : i32
    return %arg0, %c0_i32 : i32, i32
  }
}

</mosaic_0001>

<llo_original>
// kernel: tpu_custom_call.1
$region0: #{tpu_custom_call.1}
  #allocation0 [shape = 'u32[]', space=smem, size = 0x4, offset = 0x4, fixed_abs, tag = 'smem constant byte address 0x4 - core index']
  #allocation1 [shape = 'u32[144,128]{1,0:T(1,128)}', space=vmem, size = 0x12000, scoped, tag = 'internal scratch']
  %s0 = inlined_call_operand.vmem [shape: f32[8,256], index: 0, kind: input, shape index: {}]
  %s1 = inlined_call_operand.vmem [shape: f32[4,256], index: 1, kind: input, shape index: {}]
  %s2 = inlined_call_operand.vmem [shape: f32[8,1], index: 2, kind: input, shape index: {}]
  %s3 = inlined_call_operand.vmem [shape: f32[8,1], index: 3, kind: input, shape index: {}]
  %s4 = inlined_call_operand.vmem [shape: f32[8,72], index: 4, kind: input, shape index: {}]
  %s5 = inlined_call_operand.vmem [shape: f32[8,1], index: 5, kind: input, shape index: {}]
  %s6 = inlined_call_operand.vmem [shape: f32[8,1], index: 6, kind: input, shape index: {}]
  %s7 = inlined_call_operand.vmem [shape: f32[8,1], index: 7, kind: input, shape index: {}]
  %s8 = inlined_call_operand.vmem [shape: f32[8,72], index: 8, kind: input, shape index: {}]
  %s9 = inlined_call_operand.vmem [shape: f32[8,1], index: 9, kind: input, shape index: {}]
  %s10 = inlined_call_operand.hbm [shape: f32[8,256], index: 10, kind: output, shape index: {}]
  %s11 = sld [smem:[#allocation0]]
  $region50: #{tpu_custom_call.1} parent=0
    _
  %s13 = ssub.s32 1, %s11
  %s14 = scalar_select 0, %s13, %s11
  $region1: #{tpu_custom_call.1} parent=0
    #allocation2 [shape = 'u8[8192]{0}', space=vmem, size = 0x2000, scoped, tag = 'output window, operand 0, single buffered']
    #allocation3 [shape = 's32[1]{0}', space=sflag, size = 0x4, scoped, tag = 'scoped memory for tpu_custom_call.1']
    %15 = vsyncpa [#allocation3], 0
    // Predicated region
    $region2: #{tpu_custom_call.1} parent=1 // pred_check
      _
    $region3: #{tpu_custom_call.1} parent=1 // pred_check_branch
      %17 = sbr.rel (0) target = $region5
    $region4: #{tpu_custom_call.1} parent=1 // pred_region
      _
    $region5: #{tpu_custom_call.1} parent=1 // pred_fallthru
      _
    // Predicated region
    $region6: #{tpu_custom_call.1} parent=1 // pred_check
      _
    $region7: #{tpu_custom_call.1} parent=1 // pred_check_branch
      %19 = sbr.rel (0) target = $region9
    $region8: #{tpu_custom_call.1} parent=1 // pred_region
      _
    $region9: #{tpu_custom_call.1} parent=1 // pred_fallthru
      _
    // Predicated region
    $region10: #{tpu_custom_call.1} parent=1 // pred_check
      _
    $region11: #{tpu_custom_call.1} parent=1 // pred_check_branch
      %21 = sbr.rel (0) target = $region13
    $region12: #{tpu_custom_call.1} parent=1 // pred_region
      _
    $region13: #{tpu_custom_call.1} parent=1 // pred_fallthru
      _
    // Predicated region
    $region14: #{tpu_custom_call.1} parent=1 // pred_check
      _
    $region15: #{tpu_custom_call.1} parent=1 // pred_check_branch
      %23 = sbr.rel (0) target = $region17
    $region16: #{tpu_custom_call.1} parent=1 // pred_region
      _
    $region17: #{tpu_custom_call.1} parent=1 // pred_fallthru
      _
    // Predicated region
    $region18: #{tpu_custom_call.1} parent=1 // pred_check
      _
    $region19: #{tpu_custom_call.1} parent=1 // pred_check_branch
      %25 = sbr.rel (0) target = $region21
    $region20: #{tpu_custom_call.1} parent=1 // pred_region
      _
    $region21: #{tpu_custom_call.1} parent=1 // pred_fallthru
      _
    // Predicated region
    $region22: #{tpu_custom_call.1} parent=1 // pred_check
      _
    $region23: #{tpu_custom_call.1} parent=1 // pred_check_branch
      %27 = sbr.rel (0) target = $region25
    $region24: #{tpu_custom_call.1} parent=1 // pred_region
      _
    $region25: #{tpu_custom_call.1} parent=1 // pred_fallthru
      _
    // Predicated region
    $region26: #{tpu_custom_call.1} parent=1 // pred_check
      _
    $region27: #{tpu_custom_call.1} parent=1 // pred_check_branch
      %29 = sbr.rel (0) target = $region29
    $region28: #{tpu_custom_call.1} parent=1 // pred_region
      _
    $region29: #{tpu_custom_call.1} parent=1 // pred_fallthru
      _
    // Predicated region
    $region30: #{tpu_custom_call.1} parent=1 // pred_check
      _
    $region31: #{tpu_custom_call.1} parent=1 // pred_check_branch
      %31 = sbr.rel (0) target = $region33
    $region32: #{tpu_custom_call.1} parent=1 // pred_region
      _
    $region33: #{tpu_custom_call.1} parent=1 // pred_fallthru
      _
    // Predicated region
    $region34: #{tpu_custom_call.1} parent=1 // pred_check
      _
    $region35: #{tpu_custom_call.1} parent=1 // pred_check_branch
      %33 = sbr.rel (0) target = $region37
    $region36: #{tpu_custom_call.1} parent=1 // pred_region
      _
    $region37: #{tpu_custom_call.1} parent=1 // pred_fallthru
      _
    // Predicated region
    $region38: #{tpu_custom_call.1} parent=1 // pred_check
      _
    $region39: #{tpu_custom_call.1} parent=1 // pred_check_branch
      %35 = sbr.rel (0) target = $region41
    $region40: #{tpu_custom_call.1} parent=1 // pred_region
      _
    $region41: #{tpu_custom_call.1} parent=1 // pred_fallthru
      _
    %v36 = vld [vmem:[%s0] sm:$0xff]
    %v37 = vld [vmem:[%s0 + $0x8] sm:$0xff]
    %v38 = vld [vmem:[%s1] sm:$0xff]
    %v40 = vlaneseq
    %v41 = vshrl.u32 %v40, 7
    %v42 = vsub.s32 0, %v41
    %v43 = vrot.slane %v38, %v42
    %v44 = vlaneseq
    %v45 = vshrl.u32 %v44, 7
    %v46 = vsub.s32 4, %v45
    %v47 = vrot.slane %v38, %v46
    %v50 = vlaneseq
    %v51 = vshrl.u32 %v50, 7
    %v52 = vsub.s32 0, %v51
    %v53 = vrot.slane %v43, %v52
    %v54 = vlaneseq
    %v55 = vshrl.u32 %v54, 7
    %v56 = vsub.s32 0, %v55
    %v57 = vrot.slane %v47, %v56
    %vm58 = vcmp.gt.f32.partialorder %v53, 0.5
    %vm59 = vcmp.gt.f32.partialorder %v57, 0.5
    %v60 = vlaneseq
    %v61 = vshrl.u32 %v60, 7
    %v62 = vsub.s32 1, %v61
    %v63 = vrot.slane %v38, %v62
    %v64 = vlaneseq
    %v65 = vshrl.u32 %v64, 7
    %v66 = vsub.s32 5, %v65
    %v67 = vrot.slane %v38, %v66
    %v70 = vlaneseq
    %v71 = vshrl.u32 %v70, 7
    %v72 = vsub.s32 1, %v71
    %v73 = vrot.slane %v63, %v72
    %v74 = vlaneseq
    %v75 = vshrl.u32 %v74, 7
    %v76 = vsub.s32 1, %v75
    %v77 = vrot.slane %v67, %v76
    %vm78 = vcmp.gt.f32.partialorder %v73, 0.5
    %vm79 = vcmp.gt.f32.partialorder %v77, 0.5
    %v80 = vlaneseq
    %v81 = vshrl.u32 %v80, 7
    %v82 = vsub.s32 2, %v81
    %v83 = vrot.slane %v38, %v82
    %v84 = vlaneseq
    %v85 = vshrl.u32 %v84, 7
    %v86 = vsub.s32 6, %v85
    %v87 = vrot.slane %v38, %v86
    %v90 = vlaneseq
    %v91 = vshrl.u32 %v90, 7
    %v92 = vsub.s32 2, %v91
    %v93 = vrot.slane %v83, %v92
    %v94 = vlaneseq
    %v95 = vshrl.u32 %v94, 7
    %v96 = vsub.s32 2, %v95
    %v97 = vrot.slane %v87, %v96
    %vm98 = vcmp.gt.f32.partialorder %v93, 0.5
    %vm99 = vcmp.gt.f32.partialorder %v97, 0.5
    %v100 = vlaneseq
    %v101 = vshrl.u32 %v100, 7
    %v102 = vsub.s32 3, %v101
    %v103 = vrot.slane %v38, %v102
    %v104 = vlaneseq
    %v105 = vshrl.u32 %v104, 7
    %v106 = vsub.s32 7, %v105
    %v107 = vrot.slane %v38, %v106
    %v110 = vlaneseq
    %v111 = vshrl.u32 %v110, 7
    %v112 = vsub.s32 3, %v111
    %v113 = vrot.slane %v103, %v112
    %v114 = vlaneseq
    %v115 = vshrl.u32 %v114, 7
    %v116 = vsub.s32 3, %v115
    %v117 = vrot.slane %v107, %v116
    %vm118 = vcmp.gt.f32.partialorder %v113, 0.5
    %vm119 = vcmp.gt.f32.partialorder %v117, 0.5
    %v120 = vld [vmem:[%s2] sm:$0xff]
    %v121 = vld [vmem:[%s3] sm:$0xff]
    %v122 = vadd.f32 %v36, %v37
    %123 = vadd.xlane.f32.xlu0 %v122
    %v124 = vpop.xlane.xlu0 %123
    %v125 = vmul.f32 %v36, %v36
    %v126 = vmul.f32 %v37, %v37
    %v127 = vadd.f32 %v125, %v126
    %128 = vadd.xlane.f32.xlu0 %v127
    %v129 = vpop.xlane.xlu0 %128
    %v130 = vmul.f32 %v124, 0.00390625
    %v131 = vmul.f32 %v124, %v130
    %v132 = vsub.f32 %v129, %v131
    %v133 = vmul.f32 %v132, 0.003921569
    %v134 = vadd.f32 %v133, 1e-05
    %v135 = vrsqrt.pop %v134
    %v136 = vmul.f32 %v120, %v135
    %v137 = vmul.f32 %v130, %v136
    %v138 = vsub.f32 %v121, %v137
    %140 = vset.pattern.permute.xlu0 0
    %141 = vperm.xlu0 %140, %v136
    %v142 = vpop.permute.xlu0 %141
    %v144 = vmul.f32 %v36, %v142
    %v145 = vmul.f32 %v37, %v142
    %147 = vset.pattern.permute.xlu0 0
    %148 = vperm.xlu0 %147, %v138
    %v149 = vpop.permute.xlu0 %148
    %v151 = vadd.f32 %v144, %v149
    %v152 = vadd.f32 %v145, %v149
    %vm153 = vcmp.gt.f32.partialorder %v151, 0.0
    %vm154 = vcmp.gt.f32.partialorder %v152, 0.0
    %v155 = vmul.f32 %v151, 0.2
    %v156 = vmul.f32 %v152, 0.2
    %v157 = vsel %vm153, %v151, %v155
    %v158 = vsel %vm154, %v152, %v156
    %v159 = vld [vmem:[%s4] sm:$0xff]
    %v160 = vld [vmem:[%s5] sm:$0xff]
    %161 = vrot.lane.b32.xlu0 %v157, 1
    %v162 = vpop.permute.xlu0 %161
    %163 = vrot.lane.b32.xlu0 %v158, 1
    %v164 = vpop.permute.xlu0 %163
    %v165 = vlaneseq
    %v166 = vand.u32 %v165, 127
    %vm167 = vcmp.lt.s32.totalorder %v166, 1
    %v168 = vsel %vm167, %v162, %v164
    %v169 = vsel %vm167, %v164, %v162
    %170 = vrot.lane.b32.xlu0 %v157, 127
    %v171 = vpop.permute.xlu0 %170
    %172 = vrot.lane.b32.xlu0 %v158, 127
    %v173 = vpop.permute.xlu0 %172
    %vm174 = vcmp.lt.s32.totalorder %v166, 127
    %v175 = vsel %vm174, %v171, %v173
    %v176 = vsel %vm174, %v173, %v171
    %v177 = vsel %vm58, %v175, %v169
    %v178 = vsel %vm59, %v176, %v168
    %v179 = vsel %vm78, %v169, %v175
    %v180 = vsel %vm79, %v168, %v176
    %181 = vrot.lane.b32.xlu0 %v177, 16
    %v182 = vpop.permute.xlu0 %181
    %183 = vrot.lane.b32.xlu0 %v178, 16
    %v184 = vpop.permute.xlu0 %183
    %vm185 = vcmp.lt.s32.totalorder %v166, 16
    %v186 = vsel %vm185, %v182, %v184
    %v187 = vsel %vm185, %v184, %v182
    %188 = vrot.lane.b32.xlu0 %v177, 112
    %v189 = vpop.permute.xlu0 %188
    %190 = vrot.lane.b32.xlu0 %v178, 112
    %v191 = vpop.permute.xlu0 %190
    %vm192 = vcmp.lt.s32.totalorder %v166, 112
    %v193 = vsel %vm192, %v189, %v191
    %v194 = vsel %vm192, %v191, %v189
    %v195 = vsel %vm98, %v193, %v187
    %v196 = vsel %vm99, %v194, %v186
    %v197 = vsel %vm118, %v187, %v193
    %v198 = vsel %vm119, %v186, %v194
    %199 = vrot.lane.b32.xlu0 %v157, 16
    %v200 = vpop.permute.xlu0 %199
    %201 = vrot.lane.b32.xlu0 %v158, 16
    %v202 = vpop.permute.xlu0 %201
    %v203 = vsel %vm185, %v200, %v202
    %v204 = vsel %vm185, %v202, %v200
    %205 = vrot.lane.b32.xlu0 %v157, 112
    %v206 = vpop.permute.xlu0 %205
    %207 = vrot.lane.b32.xlu0 %v158, 112
    %v208 = vpop.permute.xlu0 %207
    %v209 = vsel %vm192, %v206, %v208
    %v210 = vsel %vm192, %v208, %v206
    %v211 = vsel %vm98, %v209, %v204
    %v212 = vsel %vm99, %v210, %v203
    %v213 = vsel %vm118, %v204, %v209
    %v214 = vsel %vm119, %v203, %v210
    %215 = vrot.lane.b32.xlu0 %v179, 16
    %v216 = vpop.permute.xlu0 %215
    %217 = vrot.lane.b32.xlu0 %v180, 16
    %v218 = vpop.permute.xlu0 %217
    %v219 = vsel %vm185, %v216, %v218
    %v220 = vsel %vm185, %v218, %v216
    %221 = vrot.lane.b32.xlu0 %v179, 112
    %v222 = vpop.permute.xlu0 %221
    %223 = vrot.lane.b32.xlu0 %v180, 112
    %v224 = vpop.permute.xlu0 %223
    %v225 = vsel %vm192, %v222, %v224
    %v226 = vsel %vm192, %v224, %v222
    %v227 = vsel %vm98, %v225, %v220
    %v228 = vsel %vm99, %v226, %v219
    %v229 = vsel %vm118, %v220, %v225
    %v230 = vsel %vm119, %v219, %v226
    %232 = vset.pattern.permute.xlu0 0
    %233 = vperm.xlu0 %232, %v160
    %v234 = vpop.permute.xlu0 %233
    %vm236 = vcmask 588800
    %v238 = vsel %vm236, %v159, 0
    %240 = vmatprep.subr.mxu0 %v196
    %241 = vmatpush1.msra.mxu0 %v195
    %242 = vmatprep.subr.mxu0 %v212
    %243 = vmatpush1.msra.mxu0 %v211
    %244 = vmatprep.subr.mxu0 %v228
    %245 = vmatpush1.msra.mxu0 %v227
    %246 = vmatprep.subr.mxu0 %v178
    %247 = vmatpush1.msra.mxu0 %v177
    %248 = vmatprep.subr.mxu0 %v158
    %249 = vmatpush1.msra.mxu0 %v157
    %250 = vmatprep.subr.mxu0 %v180
    %251 = vmatpush1.msra.mxu0 %v179
    %252 = vmatprep.subr.mxu0 %v198
    %253 = vmatpush1.msra.mxu0 %v197
    %254 = vmatprep.subr.mxu0 %v214
    %255 = vmatpush1.msra.mxu0 %v213
    %256 = vmatprep.subr.mxu0 %v230
    %257 = vmatpush1.msra.mxu0 %v229
    %258 = vmatprep.subr.mxu0 0.0
    %259 = vmatpush1.msra.mxu0 0.0
    %260 = vmatprep.subr.mxu0 0.0
    %261 = vmatpush1.msra.mxu0 0.0
    %262 = vmatprep.subr.mxu0 0.0
    %263 = vmatpush1.msra.mxu0 0.0
    %264 = vmatprep.subr.mxu0 0.0
    %265 = vmatpush1.msra.mxu0 0.0
    %266 = vmatprep.subr.mxu0 0.0
    %267 = vmatpush1.msra.mxu0 0.0
    %268 = vmatprep.subr.mxu0 0.0
    %269 = vmatpush1.msra.mxu0 0.0
    %270 = vmatprep.subr.mxu0 0.0
    %271 = vmatpush1.msra.mxu0 0.0
    %272 = vmatprep.subr.mxu0 0.0
    %273 = vmatpush1.msra.mxu0 0.0
    %274 = vmatprep.subr.mxu0 0.0
    %275 = vmatpush1.msra.mxu0 0.0
    %276 = vmatprep.subr.mxu0 0.0
    %277 = vmatpush1.msra.mxu0 0.0
    %278 = vmatprep.subr.mxu0 0.0
    %279 = vmatpush1.msra.mxu0 0.0
    %280 = vmatprep.subr.mxu0 0.0
    %281 = vmatpush1.msra.mxu0 0.0
    %282 = vmatprep.subr.mxu0 0.0
    %283 = vmatpush1.msra.mxu0 0.0
    %284 = vmatprep.subr.mxu0 0.0
    %285 = vmatpush1.msra.mxu0 0.0
    %286 = vmatprep.subr.mxu0 0.0
    %287 = vmatpush1.msra.mxu0 0.0
    %288 = vmatprep.subr.mxu0 0.0
    %289 = vmatpush1.msra.mxu0 0.0
    %290 = vmatprep.subr.mxu0 0.0
    %291 = vmatpush1.msra.mxu0 0.0
    %292 = vmatprep.subr.mxu0 0.0
    %293 = vmatpush1.msra.mxu0 0.0
    %294 = vmatprep.subr.mxu0 0.0
    %295 = vmatpush1.msra.mxu0 0.0
    %296 = vmatprep.subr.mxu0 0.0
    %297 = vmatpush1.msra.mxu0 0.0
    %298 = vmatprep.subr.mxu0 0.0
    %299 = vmatpush1.msra.mxu0 0.0
    %300 = vmatprep.subr.mxu0 0.0
    %301 = vmatpush1.msra.mxu0 0.0
    %302 = vmatprep.subr.mxu0 0.0
    %303 = vmatpush1.msra.mxu0 0.0
    %304 = vmatprep.mubr.f32.mxu0 0.0
    %305 = vmatmul.mubr.f32.gmra.mrb[0].mxu0 %v238
    %v306 = vpop.f32.mrb[0].mxu0
    %v307 = vadd.f32 %v234, %v306
    %v308 = vpop.f32.mrb[0].mxu0
    %v309 = vadd.f32 %v234, %v308
    %310 = vdwg.mxu0
    %v311 = vld [vmem:[%s6] sm:$0xff]
    %v312 = vld [vmem:[%s7] sm:$0xff]
    %v313 = vadd.f32 %v307, %v309
    %314 = vadd.xlane.f32.xlu0 %v313
    %v315 = vpop.xlane.xlu0 %314
    %v316 = vmul.f32 %v307, %v307
    %v317 = vmul.f32 %v309, %v309
    %v318 = vadd.f32 %v316, %v317
    %319 = vadd.xlane.f32.xlu0 %v318
    %v320 = vpop.xlane.xlu0 %319
    %v321 = vmul.f32 %v315, 0.00390625
    %v322 = vmul.f32 %v315, %v321
    %v323 = vsub.f32 %v320, %v322
    %v324 = vmul.f32 %v323, 0.003921569
    %v325 = vadd.f32 %v324, 1e-05
    %v326 = vrsqrt.pop %v325
    %v327 = vmul.f32 %v311, %v326
    %v328 = vmul.f32 %v321, %v327
    %v329 = vsub.f32 %v312, %v328
    %331 = vset.pattern.permute.xlu0 0
    %332 = vperm.xlu0 %331, %v327
    %v333 = vpop.permute.xlu0 %332
    %v335 = vmul.f32 %v307, %v333
    %v336 = vmul.f32 %v309, %v333
    %338 = vset.pattern.permute.xlu0 0
    %339 = vperm.xlu0 %338, %v329
    %v340 = vpop.permute.xlu0 %339
    %v342 = vadd.f32 %v335, %v340
    %v343 = vadd.f32 %v336, %v340
    %vm344 = vcmp.gt.f32.partialorder %v342, 0.0
    %vm345 = vcmp.gt.f32.partialorder %v343, 0.0
    %v346 = vmul.f32 %v342, 0.2
    %v347 = vmul.f32 %v343, 0.2
    %v348 = vsel %vm344, %v342, %v346
    %v349 = vsel %vm345, %v343, %v347
    %v350 = vld [vmem:[%s8] sm:$0xff]
    %v351 = vld [vmem:[%s9] sm:$0xff]
    %352 = vrot.lane.b32.xlu0 %v348, 1
    %v353 = vpop.permute.xlu0 %352
    %354 = vrot.lane.b32.xlu0 %v349, 1
    %v355 = vpop.permute.xlu0 %354
    %v356 = vsel %vm167, %v353, %v355
    %v357 = vsel %vm167, %v355, %v353
    %358 = vrot.lane.b32.xlu0 %v348, 127
    %v359 = vpop.permute.xlu0 %358
    %360 = vrot.lane.b32.xlu0 %v349, 127
    %v361 = vpop.permute.xlu0 %360
    %v362 = vsel %vm174, %v359, %v361
    %v363 = vsel %vm174, %v361, %v359
    %v364 = vsel %vm58, %v362, %v357
    %v365 = vsel %vm59, %v363, %v356
    %v366 = vsel %vm78, %v357, %v362
    %v367 = vsel %vm79, %v356, %v363
    %368 = vrot.lane.b32.xlu0 %v364, 16
    %v369 = vpop.permute.xlu0 %368
    %370 = vrot.lane.b32.xlu0 %v365, 16
    %v371 = vpop.permute.xlu0 %370
    %v372 = vsel %vm185, %v369, %v371
    %v373 = vsel %vm185, %v371, %v369
    %374 = vrot.lane.b32.xlu0 %v364, 112
    %v375 = vpop.permute.xlu0 %374
    %376 = vrot.lane.b32.xlu0 %v365, 112
    %v377 = vpop.permute.xlu0 %376
    %v378 = vsel %vm192, %v375, %v377
    %v379 = vsel %vm192, %v377, %v375
    %v380 = vsel %vm98, %v378, %v373
    %v381 = vsel %vm99, %v379, %v372
    %v382 = vsel %vm118, %v373, %v378
    %v383 = vsel %vm119, %v372, %v379
    %384 = vrot.lane.b32.xlu0 %v348, 16
    %v385 = vpop.permute.xlu0 %384
    %386 = vrot.lane.b32.xlu0 %v349, 16
    %v387 = vpop.permute.xlu0 %386
    %v388 = vsel %vm185, %v385, %v387
    %v389 = vsel %vm185, %v387, %v385
    %390 = vrot.lane.b32.xlu0 %v348, 112
    %v391 = vpop.permute.xlu0 %390
    %392 = vrot.lane.b32.xlu0 %v349, 112
    %v393 = vpop.permute.xlu0 %392
    %v394 = vsel %vm192, %v391, %v393
    %v395 = vsel %vm192, %v393, %v391
    %v396 = vsel %vm98, %v394, %v389
    %v397 = vsel %vm99, %v395, %v388
    %v398 = vsel %vm118, %v389, %v394
    %v399 = vsel %vm119, %v388, %v395
    %400 = vrot.lane.b32.xlu0 %v366, 16
    %v401 = vpop.permute.xlu0 %400
    %402 = vrot.lane.b32.xlu0 %v367, 16
    %v403 = vpop.permute.xlu0 %402
    %v404 = vsel %vm185, %v401, %v403
    %v405 = vsel %vm185, %v403, %v401
    %406 = vrot.lane.b32.xlu0 %v366, 112
    %v407 = vpop.permute.xlu0 %406
    %408 = vrot.lane.b32.xlu0 %v367, 112
    %v409 = vpop.permute.xlu0 %408
    %v410 = vsel %vm192, %v407, %v409
    %v411 = vsel %vm192, %v409, %v407
    %v412 = vsel %vm98, %v410, %v405
    %v413 = vsel %vm99, %v411, %v404
    %v414 = vsel %vm118, %v405, %v410
    %v415 = vsel %vm119, %v404, %v411
    %417 = vset.pattern.permute.xlu0 0
    %418 = vperm.xlu0 %417, %v351
    %v419 = vpop.permute.xlu0 %418
    %v422 = vsel %vm236, %v350, 0
    %424 = vmatprep.subr.mxu0 %v381
    %425 = vmatpush1.msra.mxu0 %v380
    %426 = vmatprep.subr.mxu0 %v397
    %427 = vmatpush1.msra.mxu0 %v396
    %428 = vmatprep.subr.mxu0 %v413
    %429 = vmatpush1.msra.mxu0 %v412
    %430 = vmatprep.subr.mxu0 %v365
    %431 = vmatpush1.msra.mxu0 %v364
    %432 = vmatprep.subr.mxu0 %v349
    %433 = vmatpush1.msra.mxu0 %v348
    %434 = vmatprep.subr.mxu0 %v367
    %435 = vmatpush1.msra.mxu0 %v366
    %436 = vmatprep.subr.mxu0 %v383
    %437 = vmatpush1.msra.mxu0 %v382
    %438 = vmatprep.subr.mxu0 %v399
    %439 = vmatpush1.msra.mxu0 %v398
    %440 = vmatprep.subr.mxu0 %v415
    %441 = vmatpush1.msra.mxu0 %v414
    %442 = vmatprep.subr.mxu0 0.0
    %443 = vmatpush1.msra.mxu0 0.0
    %444 = vmatprep.subr.mxu0 0.0
    %445 = vmatpush1.msra.mxu0 0.0
    %446 = vmatprep.subr.mxu0 0.0
    %447 = vmatpush1.msra.mxu0 0.0
    %448 = vmatprep.subr.mxu0 0.0
    %449 = vmatpush1.msra.mxu0 0.0
    %450 = vmatprep.subr.mxu0 0.0
    %451 = vmatpush1.msra.mxu0 0.0
    %452 = vmatprep.subr.mxu0 0.0
    %453 = vmatpush1.msra.mxu0 0.0
    %454 = vmatprep.subr.mxu0 0.0
    %455 = vmatpush1.msra.mxu0 0.0
    %456 = vmatprep.subr.mxu0 0.0
    %457 = vmatpush1.msra.mxu0 0.0
    %458 = vmatprep.subr.mxu0 0.0
    %459 = vmatpush1.msra.mxu0 0.0
    %460 = vmatprep.subr.mxu0 0.0
    %461 = vmatpush1.msra.mxu0 0.0
    %462 = vmatprep.subr.mxu0 0.0
    %463 = vmatpush1.msra.mxu0 0.0
    %464 = vmatprep.subr.mxu0 0.0
    %465 = vmatpush1.msra.mxu0 0.0
    %466 = vmatprep.subr.mxu0 0.0
    %467 = vmatpush1.msra.mxu0 0.0
    %468 = vmatprep.subr.mxu0 0.0
    %469 = vmatpush1.msra.mxu0 0.0
    %470 = vmatprep.subr.mxu0 0.0
    %471 = vmatpush1.msra.mxu0 0.0
    %472 = vmatprep.subr.mxu0 0.0
    %473 = vmatpush1.msra.mxu0 0.0
    %474 = vmatprep.subr.mxu0 0.0
    %475 = vmatpush1.msra.mxu0 0.0
    %476 = vmatprep.subr.mxu0 0.0
    %477 = vmatpush1.msra.mxu0 0.0
    %478 = vmatprep.subr.mxu0 0.0
    %479 = vmatpush1.msra.mxu0 0.0
    %480 = vmatprep.subr.mxu0 0.0
    %481 = vmatpush1.msra.mxu0 0.0
    %482 = vmatprep.subr.mxu0 0.0
    %483 = vmatpush1.msra.mxu0 0.0
    %484 = vmatprep.subr.mxu0 0.0
    %485 = vmatpush1.msra.mxu0 0.0
    %486 = vmatprep.subr.mxu0 0.0
    %487 = vmatpush1.msra.mxu0 0.0
    %488 = vmatprep.mubr.f32.mxu0 0.0
    %489 = vmatmul.mubr.f32.gmra.mrb[0].mxu0 %v422
    %v490 = vpop.f32.mrb[0].mxu0
    %v491 = vadd.f32 %v419, %v490
    %v492 = vpop.f32.mrb[0].mxu0
    %v493 = vadd.f32 %v419, %v492
    %494 = vdwg.mxu0
    %v495 = vadd.f32 %v491, %v36
    %v496 = vadd.f32 %v493, %v37
    %497 = vst [vmem:[#allocation2] sm:$0xff] %v495
    %498 = vst [vmem:[#allocation2 + $0x8] sm:$0xff] %v496
    // Predicated region
    $region42: #{tpu_custom_call.1} parent=1 // pred_check
      _
    $region43: #{tpu_custom_call.1} parent=1 // pred_check_branch
      %500 = sbr.rel (0) target = $region45
    $region44: #{tpu_custom_call.1} parent=1 // pred_region
      %s502 = ssub.s32 256, 256
      %503 = vsyncadd [#allocation3], %s502
      %s505 = sshll.u32 [#allocation2], 4
      %s506 = int_to_ptr.vmem [resolvable:$true] %s505
      %508 = dma.vmem_to_hbm [thread:$0]  %s506, 256, %s10, [#allocation3]
    $region45: #{tpu_custom_call.1} parent=1 // pred_fallthru
      _
    // Predicated region
    $region46: #{tpu_custom_call.1} parent=1 // pred_check
      _
    $region47: #{tpu_custom_call.1} parent=1 // pred_check_branch
      %510 = sbr.rel (0) target = $region49
    $region48: #{tpu_custom_call.1} parent=1 // pred_region
      %511 = dma.done [#allocation3], 256
    $region49: #{tpu_custom_call.1} parent=1 // pred_fallthru
      _
    %512 = vsyncpa [#allocation3], 1

</llo_original>
